<compile_context>
chip_gen: v7x
topology: tpu7x:2x2x1
jax: 0.10.0
libtpu: 0.0.40
codegen_flags: <defaults>
</compile_context>

<pallas_src>
import functools

import jax
import jax.numpy as jnp
from jax.experimental import pallas as pl
from jax.experimental.pallas import tpu as pltpu

LANE = 128
SUBLANE = 8


def _round_up(x: int, m: int) -> int:
    return ((x + m - 1) // m) * m


def _regressor_kernel(x_ref, w1_ref, b1_ref, w2_ref, b2_ref, w3_ref, b3_ref, o_ref):
    """One batch tile: Linear->ReLU->Linear->ReLU->Linear, fully fused on-chip."""
    cdt = x_ref.dtype  # operand dtype fed to the MXU (e.g. bf16)

    # featurizer layer 1
    h1 = jnp.dot(x_ref[...], w1_ref[...], preferred_element_type=jnp.float32)
    h1 = jnp.maximum(h1 + b1_ref[...], 0.0).astype(cdt)

    # featurizer layer 2
    h2 = jnp.dot(h1, w2_ref[...], preferred_element_type=jnp.float32)
    h2 = jnp.maximum(h2 + b2_ref[...], 0.0).astype(cdt)

    # regressor head (lane-dense padded N)
    out = jnp.dot(h2, w3_ref[...], preferred_element_type=jnp.float32) + b3_ref[...]
    o_ref[...] = out.astype(o_ref.dtype)


def _vmem_budget_bytes(tile_b, d_in_p, h_p, d_out_p, compute_dtype):
    cb = jnp.dtype(compute_dtype).itemsize
    weights = (d_in_p * h_p + h_p * h_p + h_p * d_out_p) * cb \
              + (2 * h_p + d_out_p) * 4                         # f32 biases
    io = 2 * tile_b * d_in_p * cb + 2 * tile_b * d_out_p * 4    # double-buffered x / out
    acts = 2 * tile_b * h_p * 4                                 # f32 intermediates h1, h2
    total = 2 * weights + io + acts
    # 2x safety margin; floor 8 MiB, cap well under v7x's 64 MiB physical VMEM.
    return int(min(max(2 * total, 8 << 20), 48 << 20))


@functools.partial(jax.jit, static_argnames=("tile_b", "compute_dtype"))
def regressor_forward(x, params, *, tile_b=256, compute_dtype=jnp.bfloat16):
    """x: [B, D_in] f32. params: dict(w1,b1,w2,b2,w3,b3) f32. Returns [B, D_out] f32."""
    B, D_in = x.shape
    H = params["w1"].shape[1]
    D_out = params["w3"].shape[1]

    # lane-dense padding of feature dims; batch padded to the tile
    d_in_p = _round_up(max(D_in, LANE), LANE)
    h_p = _round_up(max(H, LANE), LANE)
    d_out_p = _round_up(max(D_out, LANE), LANE)

    tb = min(tile_b, _round_up(B, SUBLANE))
    tb = _round_up(tb, SUBLANE)
    B_p = _round_up(B, tb)

    cdt = compute_dtype

    def pad2(a, r, c, dtype):
        a = a.astype(dtype)
        return jnp.pad(a, ((0, r - a.shape[0]), (0, c - a.shape[1])))

    x_p = pad2(x, B_p, d_in_p, cdt)
    w1 = pad2(params["w1"], d_in_p, h_p, cdt)
    w2 = pad2(params["w2"], h_p, h_p, cdt)
    w3 = pad2(params["w3"], h_p, d_out_p, cdt)
    b1 = pad2(params["b1"].reshape(1, -1), 1, h_p, jnp.float32)
    b2 = pad2(params["b2"].reshape(1, -1), 1, h_p, jnp.float32)
    b3 = pad2(params["b3"].reshape(1, -1), 1, d_out_p, jnp.float32)

    grid = (pl.cdiv(B_p, tb),)
    bcast = lambda i: (0, 0)  # weights/biases: same block every step (VMEM-resident)

    out_p = pl.pallas_call(
        _regressor_kernel,
        out_shape=jax.ShapeDtypeStruct((B_p, d_out_p), jnp.float32),
        grid_spec=pltpu.PrefetchScalarGridSpec(
            num_scalar_prefetch=0,
            grid=grid,
            in_specs=[
                pl.BlockSpec((tb, d_in_p), lambda i: (i, 0)),
                pl.BlockSpec((d_in_p, h_p), bcast),
                pl.BlockSpec((1, h_p), bcast),
                pl.BlockSpec((h_p, h_p), bcast),
                pl.BlockSpec((1, h_p), bcast),
                pl.BlockSpec((h_p, d_out_p), bcast),
                pl.BlockSpec((1, d_out_p), bcast),
            ],
            out_specs=pl.BlockSpec((tb, d_out_p), lambda i: (i, 0)),
        ),
        compiler_params=pltpu.CompilerParams(
            dimension_semantics=("parallel",),
            vmem_limit_bytes=_vmem_budget_bytes(tb, d_in_p, h_p, d_out_p, cdt),
        ),
    )(x_p, w1, b1, w2, b2, w3, b3)

    return out_p[:B, :D_out]


def init_params(key, d_in, hidden, d_out):
    ks = jax.random.split(key, 6)
    s1 = 1.0 / jnp.sqrt(d_in)
    s2 = 1.0 / jnp.sqrt(hidden)
    return {
        "w1": jax.random.uniform(ks[0], (d_in, hidden), jnp.float32, -s1, s1),
        "b1": jax.random.uniform(ks[1], (1, hidden), jnp.float32, -s1, s1),
        "w2": jax.random.uniform(ks[2], (hidden, hidden), jnp.float32, -s2, s2),
        "b2": jax.random.uniform(ks[3], (1, hidden), jnp.float32, -s2, s2),
        "w3": jax.random.uniform(ks[4], (hidden, d_out), jnp.float32, -s2, s2),
        "b3": jax.random.uniform(ks[5], (1, d_out), jnp.float32, -s2, s2),
    }


def reference_forward(x, p, compute_dtype=jnp.bfloat16):
    """Pure-JAX reference using the same operand-dtype / f32-accumulation recipe."""
    cdt = compute_dtype
    h1 = jnp.dot(x.astype(cdt), p["w1"].astype(cdt),
                 preferred_element_type=jnp.float32) + p["b1"]
    h1 = jnp.maximum(h1, 0.0)
    h2 = jnp.dot(h1.astype(cdt), p["w2"].astype(cdt),
                 preferred_element_type=jnp.float32) + p["b2"]
    h2 = jnp.maximum(h2, 0.0)
    return jnp.dot(h2.astype(cdt), p["w3"].astype(cdt),
                   preferred_element_type=jnp.float32) + p["b3"]


if __name__ == "__main__":
    # Small, deterministic demo shapes (batch not a multiple of the default tile on purpose).
    B, D_IN, HIDDEN, D_OUT = 64, 32, 64, 1
    key = jax.random.PRNGKey(0)
    kx, kp = jax.random.split(key)
    x = jax.random.normal(kx, (B, D_IN), jnp.float32)
    params = init_params(kp, D_IN, HIDDEN, D_OUT)

    out = regressor_forward(x, params, tile_b=256, compute_dtype=jnp.bfloat16)
    out = jax.block_until_ready(out)

    ref = reference_forward(x, params, compute_dtype=jnp.bfloat16)
    assert out.shape == (B, D_OUT), f"bad shape {out.shape}"
    assert jnp.allclose(out, ref, atol=1e-2, rtol=1e-2), "mismatch vs reference"

    # Sanity-check against pure-f32 math as well (looser tolerance, bf16 operands).
    ref32 = reference_forward(x, params, compute_dtype=jnp.float32)
    assert jnp.allclose(out, ref32, atol=5e-2, rtol=5e-2), "mismatch vs f32 reference"

    print("KERNEL_OK")
</pallas_src>

<mosaic_0001>
module attributes {stable_mosaic.version = 11 : i64} {
  func.func @_regressor_kernel(%arg0: i32, %arg1: memref<64x128xbf16, #tpu.memory_space<vmem>>, %arg2: memref<128x128xbf16, #tpu.memory_space<vmem>>, %arg3: memref<1x128xf32, #tpu.memory_space<vmem>>, %arg4: memref<128x128xbf16, #tpu.memory_space<vmem>>, %arg5: memref<1x128xf32, #tpu.memory_space<vmem>>, %arg6: memref<128x128xbf16, #tpu.memory_space<vmem>>, %arg7: memref<1x128xf32, #tpu.memory_space<vmem>>, %arg8: memref<64x128xf32, #tpu.memory_space<vmem>>) attributes {dimension_semantics = [#tpu.dimension_semantics<parallel>], iteration_bounds = array<i64: 1>, scalar_prefetch = 0 : i64, scratch_operands = 0 : i64, tpu.core_type = #tpu.core_type<tc>, window_params = [{transform_indices = @transform_0, window_bounds = array<i64: 64, 128>}, {pipeline_mode = #tpu.pipeline_mode<synchronous>, transform_indices = @transform_1, window_bounds = array<i64: 128, 128>}, {pipeline_mode = #tpu.pipeline_mode<synchronous>, transform_indices = @transform_2, window_bounds = array<i64: 1, 128>}, {pipeline_mode = #tpu.pipeline_mode<synchronous>, transform_indices = @transform_3, window_bounds = array<i64: 128, 128>}, {pipeline_mode = #tpu.pipeline_mode<synchronous>, transform_indices = @transform_4, window_bounds = array<i64: 1, 128>}, {pipeline_mode = #tpu.pipeline_mode<synchronous>, transform_indices = @transform_5, window_bounds = array<i64: 128, 128>}, {pipeline_mode = #tpu.pipeline_mode<synchronous>, transform_indices = @transform_6, window_bounds = array<i64: 1, 128>}, {transform_indices = @transform_7, window_bounds = array<i64: 64, 128>}]} {
    %c0 = arith.constant 0 : index
    %c0_0 = arith.constant 0 : index
    %0 = vector.load %arg1[%c0, %c0_0] : memref<64x128xbf16, #tpu.memory_space<vmem>>, vector<64x128xbf16>
    %c0_1 = arith.constant 0 : index
    %c0_2 = arith.constant 0 : index
    %1 = vector.load %arg2[%c0_1, %c0_2] : memref<128x128xbf16, #tpu.memory_space<vmem>>, vector<128x128xbf16>
    %cst = arith.constant dense<0.000000e+00> : vector<64x128xf32>
    %2 = tpu.matmul %0, %1, %cst {dimension_numbers = #tpu.dot_dimension_numbers<[1], [0], [0], [1], [0, 0, 1, 1], [], []>} : vector<64x128xbf16>, vector<128x128xbf16>, vector<64x128xf32> -> vector<64x128xf32>
    %c0_3 = arith.constant 0 : index
    %c0_4 = arith.constant 0 : index
    %3 = vector.load %arg3[%c0_3, %c0_4] : memref<1x128xf32, #tpu.memory_space<vmem>>, vector<1x128xf32>
    %4 = vector.broadcast %3 : vector<1x128xf32> to vector<64x128xf32>
    %5 = arith.addf %2, %4 : vector<64x128xf32>
    %cst_5 = arith.constant 0.000000e+00 : f32
    %6 = vector.broadcast %cst_5 : f32 to vector<64x128xf32>
    %7 = arith.maximumf %5, %6 : vector<64x128xf32>
    %8 = arith.truncf %7 : vector<64x128xf32> to vector<64x128xbf16>
    %c0_6 = arith.constant 0 : index
    %c0_7 = arith.constant 0 : index
    %9 = vector.load %arg4[%c0_6, %c0_7] : memref<128x128xbf16, #tpu.memory_space<vmem>>, vector<128x128xbf16>
    %cst_8 = arith.constant dense<0.000000e+00> : vector<64x128xf32>
    %10 = tpu.matmul %8, %9, %cst_8 {dimension_numbers = #tpu.dot_dimension_numbers<[1], [0], [0], [1], [0, 0, 1, 1], [], []>} : vector<64x128xbf16>, vector<128x128xbf16>, vector<64x128xf32> -> vector<64x128xf32>
    %c0_9 = arith.constant 0 : index
    %c0_10 = arith.constant 0 : index
    %11 = vector.load %arg5[%c0_9, %c0_10] : memref<1x128xf32, #tpu.memory_space<vmem>>, vector<1x128xf32>
    %12 = vector.broadcast %11 : vector<1x128xf32> to vector<64x128xf32>
    %13 = arith.addf %10, %12 : vector<64x128xf32>
    %cst_11 = arith.constant 0.000000e+00 : f32
    %14 = vector.broadcast %cst_11 : f32 to vector<64x128xf32>
    %15 = arith.maximumf %13, %14 : vector<64x128xf32>
    %16 = arith.truncf %15 : vector<64x128xf32> to vector<64x128xbf16>
    %c0_12 = arith.constant 0 : index
    %c0_13 = arith.constant 0 : index
    %17 = vector.load %arg6[%c0_12, %c0_13] : memref<128x128xbf16, #tpu.memory_space<vmem>>, vector<128x128xbf16>
    %cst_14 = arith.constant dense<0.000000e+00> : vector<64x128xf32>
    %18 = tpu.matmul %16, %17, %cst_14 {dimension_numbers = #tpu.dot_dimension_numbers<[1], [0], [0], [1], [0, 0, 1, 1], [], []>} : vector<64x128xbf16>, vector<128x128xbf16>, vector<64x128xf32> -> vector<64x128xf32>
    %c0_15 = arith.constant 0 : index
    %c0_16 = arith.constant 0 : index
    %19 = vector.load %arg7[%c0_15, %c0_16] : memref<1x128xf32, #tpu.memory_space<vmem>>, vector<1x128xf32>
    %20 = vector.broadcast %19 : vector<1x128xf32> to vector<64x128xf32>
    %21 = arith.addf %18, %20 : vector<64x128xf32>
    %c0_17 = arith.constant 0 : index
    %c0_18 = arith.constant 0 : index
    %22 = vector.load %arg8[%c0_17, %c0_18] : memref<64x128xf32, #tpu.memory_space<vmem>>, vector<64x128xf32>
    tpu.vector_store %arg8[%c0_17, %c0_18], %21 {strides = array<i32>} : memref<64x128xf32, #tpu.memory_space<vmem>>, vector<64x128xf32>,
    return
  }
  func.func @transform_0(%arg0: i32) -> (i32, i32) {
    %c0_i32 = arith.constant 0 : i32
    %c0_i32_0 = arith.constant 0 : i32
    return %arg0, %c0_i32 : i32, i32
  }
  func.func @transform_1(%arg0: i32) -> (i32, i32) {
    %c0_i32 = arith.constant 0 : i32
    %c0_i32_0 = arith.constant 0 : i32
    %c0_i32_1 = arith.constant 0 : i32
    return %c0_i32, %c0_i32_0 : i32, i32
  }
  func.func @transform_2(%arg0: i32) -> (i32, i32) {
    %c0_i32 = arith.constant 0 : i32
    %c0_i32_0 = arith.constant 0 : i32
    %c0_i32_1 = arith.constant 0 : i32
    return %c0_i32, %c0_i32_0 : i32, i32
  }
  func.func @transform_3(%arg0: i32) -> (i32, i32) {
    %c0_i32 = arith.constant 0 : i32
    %c0_i32_0 = arith.constant 0 : i32
    %c0_i32_1 = arith.constant 0 : i32
    return %c0_i32, %c0_i32_0 : i32, i32
  }
  func.func @transform_4(%arg0: i32) -> (i32, i32) {
    %c0_i32 = arith.constant 0 : i32
    %c0_i32_0 = arith.constant 0 : i32
    %c0_i32_1 = arith.constant 0 : i32
    return %c0_i32, %c0_i32_0 : i32, i32
  }
  func.func @transform_5(%arg0: i32) -> (i32, i32) {
    %c0_i32 = arith.constant 0 : i32
    %c0_i32_0 = arith.constant 0 : i32
    %c0_i32_1 = arith.constant 0 : i32
    return %c0_i32, %c0_i32_0 : i32, i32
  }
  func.func @transform_6(%arg0: i32) -> (i32, i32) {
    %c0_i32 = arith.constant 0 : i32
    %c0_i32_0 = arith.constant 0 : i32
    %c0_i32_1 = arith.constant 0 : i32
    return %c0_i32, %c0_i32_0 : i32, i32
  }
  func.func @transform_7(%arg0: i32) -> (i32, i32) {
    %c0_i32 = arith.constant 0 : i32
    %c0_i32_0 = arith.constant 0 : i32
    return %arg0, %c0_i32 : i32, i32
  }
}

</mosaic_0001>

<llo_original>
// kernel: regressor_forward.1
$region0: #{regressor_forward.1}
  #allocation0 [shape = 'u32[]', space=smem, size = 0x4, offset = 0x4, fixed_abs, tag = 'smem constant byte address 0x4 - core index']
  #allocation1 [shape = 'u32[144,128]{1,0:T(1,128)}', space=vmem, size = 0x12000, scoped, tag = 'internal scratch']
  %s0 = inlined_call_operand.vmem [shape: bf16[64,128], index: 0, kind: input, shape index: {}]
  %s1 = inlined_call_operand.vmem [shape: bf16[128,128], index: 1, kind: input, shape index: {}]
  %s2 = inlined_call_operand.vmem [shape: f32[1,128], index: 2, kind: input, shape index: {}]
  %s3 = inlined_call_operand.vmem [shape: bf16[128,128], index: 3, kind: input, shape index: {}]
  %s4 = inlined_call_operand.vmem [shape: f32[1,128], index: 4, kind: input, shape index: {}]
  %s5 = inlined_call_operand.vmem [shape: bf16[128,128], index: 5, kind: input, shape index: {}]
  %s6 = inlined_call_operand.vmem [shape: f32[1,128], index: 6, kind: input, shape index: {}]
  %s7 = inlined_call_operand.vmem [shape: f32[64,128], index: 7, kind: output, shape index: {}]
  %s8 = sld [smem:[#allocation0]]
  $region38: #{regressor_forward.1} parent=0
    _
  %s10 = ssub.s32 1, %s8
  %s11 = scalar_select 0, %s10, %s8
  // Predicated region
  $region2: #{regressor_forward.1} parent=0 // pred_check
    _
  $region3: #{regressor_forward.1} parent=0 // pred_check_branch
    %13 = sbr.rel (0) target = $region5
  $region4: #{regressor_forward.1} parent=0 // pred_region
    _
  $region5: #{regressor_forward.1} parent=0 // pred_fallthru
    _
  // Predicated region
  $region6: #{regressor_forward.1} parent=0 // pred_check
    _
  $region7: #{regressor_forward.1} parent=0 // pred_check_branch
    %15 = sbr.rel (0) target = $region9
  $region8: #{regressor_forward.1} parent=0 // pred_region
    _
  $region9: #{regressor_forward.1} parent=0 // pred_fallthru
    _
  // Predicated region
  $region10: #{regressor_forward.1} parent=0 // pred_check
    _
  $region11: #{regressor_forward.1} parent=0 // pred_check_branch
    %17 = sbr.rel (0) target = $region13
  $region12: #{regressor_forward.1} parent=0 // pred_region
    _
  $region13: #{regressor_forward.1} parent=0 // pred_fallthru
    _
  // Predicated region
  $region14: #{regressor_forward.1} parent=0 // pred_check
    _
  $region15: #{regressor_forward.1} parent=0 // pred_check_branch
    %19 = sbr.rel (0) target = $region17
  $region16: #{regressor_forward.1} parent=0 // pred_region
    _
  $region17: #{regressor_forward.1} parent=0 // pred_fallthru
    _
  // Predicated region
  $region18: #{regressor_forward.1} parent=0 // pred_check
    _
  $region19: #{regressor_forward.1} parent=0 // pred_check_branch
    %21 = sbr.rel (0) target = $region21
  $region20: #{regressor_forward.1} parent=0 // pred_region
    _
  $region21: #{regressor_forward.1} parent=0 // pred_fallthru
    _
  // Predicated region
  $region22: #{regressor_forward.1} parent=0 // pred_check
    _
  $region23: #{regressor_forward.1} parent=0 // pred_check_branch
    %23 = sbr.rel (0) target = $region25
  $region24: #{regressor_forward.1} parent=0 // pred_region
    _
  $region25: #{regressor_forward.1} parent=0 // pred_fallthru
    _
  // Predicated region
  $region26: #{regressor_forward.1} parent=0 // pred_check
    _
  $region27: #{regressor_forward.1} parent=0 // pred_check_branch
    %25 = sbr.rel (0) target = $region29
  $region28: #{regressor_forward.1} parent=0 // pred_region
    _
  $region29: #{regressor_forward.1} parent=0 // pred_fallthru
    _
  %v27 = vld [vmem:[%s0] sm:$0xf]
  %v28 = vld [vmem:[%s0 + $0x4] sm:$0xf]
  %v29 = vld [vmem:[%s0 + $0x8] sm:$0xf]
  %v30 = vld [vmem:[%s0 + $0xc] sm:$0xf]
  %v31 = vld [vmem:[%s0 + $0x10] sm:$0xf]
  %v32 = vld [vmem:[%s0 + $0x14] sm:$0xf]
  %v33 = vld [vmem:[%s0 + $0x18] sm:$0xf]
  %v34 = vld [vmem:[%s0 + $0x1c] sm:$0xf]
  %v35 = vld [vmem:[%s1] sm:$0xf]
  %v36 = vld [vmem:[%s1 + $0x4] sm:$0xf]
  %v37 = vld [vmem:[%s1 + $0x8] sm:$0xf]
  %v38 = vld [vmem:[%s1 + $0xc] sm:$0xf]
  %v39 = vld [vmem:[%s1 + $0x10] sm:$0xf]
  %v40 = vld [vmem:[%s1 + $0x14] sm:$0xf]
  %v41 = vld [vmem:[%s1 + $0x18] sm:$0xf]
  %v42 = vld [vmem:[%s1 + $0x1c] sm:$0xf]
  %v43 = vld [vmem:[%s1 + $0x20] sm:$0xf]
  %v44 = vld [vmem:[%s1 + $0x24] sm:$0xf]
  %v45 = vld [vmem:[%s1 + $0x28] sm:$0xf]
  %v46 = vld [vmem:[%s1 + $0x2c] sm:$0xf]
  %v47 = vld [vmem:[%s1 + $0x30] sm:$0xf]
  %v48 = vld [vmem:[%s1 + $0x34] sm:$0xf]
  %v49 = vld [vmem:[%s1 + $0x38] sm:$0xf]
  %v50 = vld [vmem:[%s1 + $0x3c] sm:$0xf]
  %v51 = vld [vmem:[%s2] sm:$0x1]
  %v53 = vlaneseq
  %v54 = vshrl.u32 %v53, 7
  %v55 = vsub.s32 0, %v54
  %v56 = vrot.slane %v51, %v55
  %v66 = vunpack.c.l.b16 %v27
  %v67 = vunpack.c.l.b16 %v28
  %v68 = vunpack.c.l.b16 %v29
  %v69 = vunpack.c.l.b16 %v30
  %v70 = vunpack.c.l.b16 %v31
  %v71 = vunpack.c.l.b16 %v32
  %v72 = vunpack.c.l.b16 %v33
  %v73 = vunpack.c.l.b16 %v34
  %v74 = vpack.c.b16 %v67, %v66
  %v75 = vpack.c.b16 %v69, %v68
  %v76 = vpack.c.b16 %v71, %v70
  %v77 = vpack.c.b16 %v73, %v72
  %v98 = vunpack.c.l.b16 %v35
  %v99 = vunpack.c.l.b16 %v36
  %v100 = vunpack.c.l.b16 %v37
  %v101 = vunpack.c.l.b16 %v38
  %v102 = vunpack.c.l.b16 %v39
  %v103 = vunpack.c.l.b16 %v40
  %v104 = vunpack.c.l.b16 %v41
  %v105 = vunpack.c.l.b16 %v42
  %v106 = vunpack.c.l.b16 %v43
  %v107 = vunpack.c.l.b16 %v44
  %v108 = vunpack.c.l.b16 %v45
  %v109 = vunpack.c.l.b16 %v46
  %v110 = vunpack.c.l.b16 %v47
  %v111 = vunpack.c.l.b16 %v48
  %v112 = vunpack.c.l.b16 %v49
  %v113 = vunpack.c.l.b16 %v50
  %v114 = vpack.c.b16 %v99, %v98
  %v115 = vpack.c.b16 %v101, %v100
  %v116 = vpack.c.b16 %v103, %v102
  %v117 = vpack.c.b16 %v105, %v104
  %v118 = vpack.c.b16 %v107, %v106
  %v119 = vpack.c.b16 %v109, %v108
  %v120 = vpack.c.b16 %v111, %v110
  %v121 = vpack.c.b16 %v113, %v112
  %130 = vmatprep.subr.bf16.mxu0 0
  %131 = vmatpush1.bf16.msra.mxu0 %v114
  %132 = vmatprep.subr.bf16.mxu0 0
  %133 = vmatpush1.bf16.msra.mxu0 %v115
  %134 = vmatprep.subr.bf16.mxu0 0
  %135 = vmatpush1.bf16.msra.mxu0 %v116
  %136 = vmatprep.subr.bf16.mxu0 0
  %137 = vmatpush1.bf16.msra.mxu0 %v117
  %138 = vmatprep.subr.bf16.mxu0 0
  %139 = vmatpush1.bf16.msra.mxu0 %v118
  %140 = vmatprep.subr.bf16.mxu0 0
  %141 = vmatpush1.bf16.msra.mxu0 %v119
  %142 = vmatprep.subr.bf16.mxu0 0
  %143 = vmatpush1.bf16.msra.mxu0 %v120
  %144 = vmatprep.subr.bf16.mxu0 0
  %145 = vmatpush1.bf16.msra.mxu0 %v121
  %146 = vmatprep.subr.bf16.mxu0 0
  %147 = vmatpush1.bf16.msra.mxu0 0
  %148 = vmatprep.subr.bf16.mxu0 0
  %149 = vmatpush1.bf16.msra.mxu0 0
  %150 = vmatprep.subr.bf16.mxu0 0
  %151 = vmatpush1.bf16.msra.mxu0 0
  %152 = vmatprep.subr.bf16.mxu0 0
  %153 = vmatpush1.bf16.msra.mxu0 0
  %154 = vmatprep.subr.bf16.mxu0 0
  %155 = vmatpush1.bf16.msra.mxu0 0
  %156 = vmatprep.subr.bf16.mxu0 0
  %157 = vmatpush1.bf16.msra.mxu0 0
  %158 = vmatprep.subr.bf16.mxu0 0
  %159 = vmatpush1.bf16.msra.mxu0 0
  %160 = vmatprep.subr.bf16.mxu0 0
  %161 = vmatpush1.bf16.msra.mxu0 0
  %162 = vmatprep.mubr.bf16.mxu0 0
  %163 = vmatmul.mubr.bf16.gmra.mrb[0].mxu0 %v74
  %v164 = vpop.f32.mrb[0].mxu0
  %v165 = vadd.f32 %v56, %v164
  %v166 = vpop.f32.mrb[0].mxu0
  %v167 = vpop.f32.mrb[0].mxu0
  %v168 = vadd.f32 %v56, %v167
  %v169 = vpop.f32.mrb[0].mxu0
  %170 = vmatprep.mubr.bf16.mxu0 0
  %171 = vmatmul.mubr.bf16.gmra.mrb[0].mxu0 %v75
  %v172 = vpop.f32.mrb[0].mxu0
  %v173 = vadd.f32 %v56, %v172
  %v174 = vpop.f32.mrb[0].mxu0
  %v175 = vpop.f32.mrb[0].mxu0
  %v176 = vadd.f32 %v56, %v175
  %v177 = vpop.f32.mrb[0].mxu0
  %178 = vmatprep.mubr.bf16.mxu0 0
  %179 = vmatmul.mubr.bf16.gmra.mrb[0].mxu0 %v76
  %v180 = vpop.f32.mrb[0].mxu0
  %v181 = vadd.f32 %v56, %v180
  %v182 = vpop.f32.mrb[0].mxu0
  %v183 = vpop.f32.mrb[0].mxu0
  %v184 = vadd.f32 %v56, %v183
  %v185 = vpop.f32.mrb[0].mxu0
  %186 = vmatprep.mubr.bf16.mxu0 0
  %187 = vmatmul.mubr.bf16.gmra.mrb[0].mxu0 %v77
  %v188 = vpop.f32.mrb[0].mxu0
  %v189 = vadd.f32 %v56, %v188
  %v190 = vpop.f32.mrb[0].mxu0
  %v191 = vpop.f32.mrb[0].mxu0
  %v192 = vadd.f32 %v56, %v191
  %v193 = vpop.f32.mrb[0].mxu0
  %194 = vdwg.mxu0
  %v195 = vmax.f32 %v165, 0.0
  %v196 = vmax.f32 %v168, 0.0
  %v197 = vmax.f32 %v173, 0.0
  %v198 = vmax.f32 %v176, 0.0
  %v199 = vmax.f32 %v181, 0.0
  %v200 = vmax.f32 %v184, 0.0
  %v201 = vmax.f32 %v189, 0.0
  %v202 = vmax.f32 %v192, 0.0
  %v203 = vpack.c.bf16 %v196, %v195
  %v204 = vpack.c.bf16 %v198, %v197
  %v205 = vpack.c.bf16 %v200, %v199
  %v206 = vpack.c.bf16 %v202, %v201
  %v207 = vld [vmem:[%s3] sm:$0xf]
  %v208 = vld [vmem:[%s3 + $0x4] sm:$0xf]
  %v209 = vld [vmem:[%s3 + $0x8] sm:$0xf]
  %v210 = vld [vmem:[%s3 + $0xc] sm:$0xf]
  %v211 = vld [vmem:[%s3 + $0x10] sm:$0xf]
  %v212 = vld [vmem:[%s3 + $0x14] sm:$0xf]
  %v213 = vld [vmem:[%s3 + $0x18] sm:$0xf]
  %v214 = vld [vmem:[%s3 + $0x1c] sm:$0xf]
  %v215 = vld [vmem:[%s3 + $0x20] sm:$0xf]
  %v216 = vld [vmem:[%s3 + $0x24] sm:$0xf]
  %v217 = vld [vmem:[%s3 + $0x28] sm:$0xf]
  %v218 = vld [vmem:[%s3 + $0x2c] sm:$0xf]
  %v219 = vld [vmem:[%s3 + $0x30] sm:$0xf]
  %v220 = vld [vmem:[%s3 + $0x34] sm:$0xf]
  %v221 = vld [vmem:[%s3 + $0x38] sm:$0xf]
  %v222 = vld [vmem:[%s3 + $0x3c] sm:$0xf]
  %v223 = vld [vmem:[%s4] sm:$0x1]
  %v225 = vlaneseq
  %v226 = vshrl.u32 %v225, 7
  %v227 = vsub.s32 0, %v226
  %v228 = vrot.slane %v223, %v227
  %v246 = vunpack.c.l.b16 %v207
  %v247 = vunpack.c.l.b16 %v208
  %v248 = vunpack.c.l.b16 %v209
  %v249 = vunpack.c.l.b16 %v210
  %v250 = vunpack.c.l.b16 %v211
  %v251 = vunpack.c.l.b16 %v212
  %v252 = vunpack.c.l.b16 %v213
  %v253 = vunpack.c.l.b16 %v214
  %v254 = vunpack.c.l.b16 %v215
  %v255 = vunpack.c.l.b16 %v216
  %v256 = vunpack.c.l.b16 %v217
  %v257 = vunpack.c.l.b16 %v218
  %v258 = vunpack.c.l.b16 %v219
  %v259 = vunpack.c.l.b16 %v220
  %v260 = vunpack.c.l.b16 %v221
  %v261 = vunpack.c.l.b16 %v222
  %v262 = vpack.c.b16 %v247, %v246
  %v263 = vpack.c.b16 %v249, %v248
  %v264 = vpack.c.b16 %v251, %v250
  %v265 = vpack.c.b16 %v253, %v252
  %v266 = vpack.c.b16 %v255, %v254
  %v267 = vpack.c.b16 %v257, %v256
  %v268 = vpack.c.b16 %v259, %v258
  %v269 = vpack.c.b16 %v261, %v260
  %278 = vmatprep.subr.bf16.mxu0 0
  %279 = vmatpush1.bf16.msra.mxu0 %v262
  %280 = vmatprep.subr.bf16.mxu0 0
  %281 = vmatpush1.bf16.msra.mxu0 %v263
  %282 = vmatprep.subr.bf16.mxu0 0
  %283 = vmatpush1.bf16.msra.mxu0 %v264
  %284 = vmatprep.subr.bf16.mxu0 0
  %285 = vmatpush1.bf16.msra.mxu0 %v265
  %286 = vmatprep.subr.bf16.mxu0 0
  %287 = vmatpush1.bf16.msra.mxu0 %v266
  %288 = vmatprep.subr.bf16.mxu0 0
  %289 = vmatpush1.bf16.msra.mxu0 %v267
  %290 = vmatprep.subr.bf16.mxu0 0
  %291 = vmatpush1.bf16.msra.mxu0 %v268
  %292 = vmatprep.subr.bf16.mxu0 0
  %293 = vmatpush1.bf16.msra.mxu0 %v269
  %294 = vmatprep.subr.bf16.mxu0 0
  %295 = vmatpush1.bf16.msra.mxu0 0
  %296 = vmatprep.subr.bf16.mxu0 0
  %297 = vmatpush1.bf16.msra.mxu0 0
  %298 = vmatprep.subr.bf16.mxu0 0
  %299 = vmatpush1.bf16.msra.mxu0 0
  %300 = vmatprep.subr.bf16.mxu0 0
  %301 = vmatpush1.bf16.msra.mxu0 0
  %302 = vmatprep.subr.bf16.mxu0 0
  %303 = vmatpush1.bf16.msra.mxu0 0
  %304 = vmatprep.subr.bf16.mxu0 0
  %305 = vmatpush1.bf16.msra.mxu0 0
  %306 = vmatprep.subr.bf16.mxu0 0
  %307 = vmatpush1.bf16.msra.mxu0 0
  %308 = vmatprep.subr.bf16.mxu0 0
  %309 = vmatpush1.bf16.msra.mxu0 0
  %310 = vmatprep.mubr.bf16.mxu0 0
  %311 = vmatmul.mubr.bf16.gmra.mrb[0].mxu0 %v203
  %v312 = vpop.f32.mrb[0].mxu0
  %v313 = vadd.f32 %v228, %v312
  %v314 = vpop.f32.mrb[0].mxu0
  %v315 = vpop.f32.mrb[0].mxu0
  %v316 = vadd.f32 %v228, %v315
  %v317 = vpop.f32.mrb[0].mxu0
  %318 = vmatprep.mubr.bf16.mxu0 0
  %319 = vmatmul.mubr.bf16.gmra.mrb[0].mxu0 %v204
  %v320 = vpop.f32.mrb[0].mxu0
  %v321 = vadd.f32 %v228, %v320
  %v322 = vpop.f32.mrb[0].mxu0
  %v323 = vpop.f32.mrb[0].mxu0
  %v324 = vadd.f32 %v228, %v323
  %v325 = vpop.f32.mrb[0].mxu0
  %326 = vmatprep.mubr.bf16.mxu0 0
  %327 = vmatmul.mubr.bf16.gmra.mrb[0].mxu0 %v205
  %v328 = vpop.f32.mrb[0].mxu0
  %v329 = vadd.f32 %v228, %v328
  %v330 = vpop.f32.mrb[0].mxu0
  %v331 = vpop.f32.mrb[0].mxu0
  %v332 = vadd.f32 %v228, %v331
  %v333 = vpop.f32.mrb[0].mxu0
  %334 = vmatprep.mubr.bf16.mxu0 0
  %335 = vmatmul.mubr.bf16.gmra.mrb[0].mxu0 %v206
  %v336 = vpop.f32.mrb[0].mxu0
  %v337 = vadd.f32 %v228, %v336
  %v338 = vpop.f32.mrb[0].mxu0
  %v339 = vpop.f32.mrb[0].mxu0
  %v340 = vadd.f32 %v228, %v339
  %v341 = vpop.f32.mrb[0].mxu0
  %342 = vdwg.mxu0
  %v343 = vmax.f32 %v313, 0.0
  %v344 = vmax.f32 %v316, 0.0
  %v345 = vmax.f32 %v321, 0.0
  %v346 = vmax.f32 %v324, 0.0
  %v347 = vmax.f32 %v329, 0.0
  %v348 = vmax.f32 %v332, 0.0
  %v349 = vmax.f32 %v337, 0.0
  %v350 = vmax.f32 %v340, 0.0
  %v351 = vpack.c.bf16 %v344, %v343
  %v352 = vpack.c.bf16 %v346, %v345
  %v353 = vpack.c.bf16 %v348, %v347
  %v354 = vpack.c.bf16 %v350, %v349
  %v355 = vld [vmem:[%s5] sm:$0xf]
  %v356 = vld [vmem:[%s5 + $0x4] sm:$0xf]
  %v357 = vld [vmem:[%s5 + $0x8] sm:$0xf]
  %v358 = vld [vmem:[%s5 + $0xc] sm:$0xf]
  %v359 = vld [vmem:[%s5 + $0x10] sm:$0xf]
  %v360 = vld [vmem:[%s5 + $0x14] sm:$0xf]
  %v361 = vld [vmem:[%s5 + $0x18] sm:$0xf]
  %v362 = vld [vmem:[%s5 + $0x1c] sm:$0xf]
  %v363 = vld [vmem:[%s5 + $0x20] sm:$0xf]
  %v364 = vld [vmem:[%s5 + $0x24] sm:$0xf]
  %v365 = vld [vmem:[%s5 + $0x28] sm:$0xf]
  %v366 = vld [vmem:[%s5 + $0x2c] sm:$0xf]
  %v367 = vld [vmem:[%s5 + $0x30] sm:$0xf]
  %v368 = vld [vmem:[%s5 + $0x34] sm:$0xf]
  %v369 = vld [vmem:[%s5 + $0x38] sm:$0xf]
  %v370 = vld [vmem:[%s5 + $0x3c] sm:$0xf]
  %v371 = vld [vmem:[%s6] sm:$0x1]
  %v373 = vlaneseq
  %v374 = vshrl.u32 %v373, 7
  %v375 = vsub.s32 0, %v374
  %v376 = vrot.slane %v371, %v375
  %v394 = vunpack.c.l.b16 %v355
  %v395 = vunpack.c.l.b16 %v356
  %v396 = vunpack.c.l.b16 %v357
  %v397 = vunpack.c.l.b16 %v358
  %v398 = vunpack.c.l.b16 %v359
  %v399 = vunpack.c.l.b16 %v360
  %v400 = vunpack.c.l.b16 %v361
  %v401 = vunpack.c.l.b16 %v362
  %v402 = vunpack.c.l.b16 %v363
  %v403 = vunpack.c.l.b16 %v364
  %v404 = vunpack.c.l.b16 %v365
  %v405 = vunpack.c.l.b16 %v366
  %v406 = vunpack.c.l.b16 %v367
  %v407 = vunpack.c.l.b16 %v368
  %v408 = vunpack.c.l.b16 %v369
  %v409 = vunpack.c.l.b16 %v370
  %v410 = vpack.c.b16 %v395, %v394
  %v411 = vpack.c.b16 %v397, %v396
  %v412 = vpack.c.b16 %v399, %v398
  %v413 = vpack.c.b16 %v401, %v400
  %v414 = vpack.c.b16 %v403, %v402
  %v415 = vpack.c.b16 %v405, %v404
  %v416 = vpack.c.b16 %v407, %v406
  %v417 = vpack.c.b16 %v409, %v408
  %426 = vmatprep.subr.bf16.mxu0 0
  %427 = vmatpush1.bf16.msra.mxu0 %v410
  %428 = vmatprep.subr.bf16.mxu0 0
  %429 = vmatpush1.bf16.msra.mxu0 %v411
  %430 = vmatprep.subr.bf16.mxu0 0
  %431 = vmatpush1.bf16.msra.mxu0 %v412
  %432 = vmatprep.subr.bf16.mxu0 0
  %433 = vmatpush1.bf16.msra.mxu0 %v413
  %434 = vmatprep.subr.bf16.mxu0 0
  %435 = vmatpush1.bf16.msra.mxu0 %v414
  %436 = vmatprep.subr.bf16.mxu0 0
  %437 = vmatpush1.bf16.msra.mxu0 %v415
  %438 = vmatprep.subr.bf16.mxu0 0
  %439 = vmatpush1.bf16.msra.mxu0 %v416
  %440 = vmatprep.subr.bf16.mxu0 0
  %441 = vmatpush1.bf16.msra.mxu0 %v417
  %442 = vmatprep.subr.bf16.mxu0 0
  %443 = vmatpush1.bf16.msra.mxu0 0
  %444 = vmatprep.subr.bf16.mxu0 0
  %445 = vmatpush1.bf16.msra.mxu0 0
  %446 = vmatprep.subr.bf16.mxu0 0
  %447 = vmatpush1.bf16.msra.mxu0 0
  %448 = vmatprep.subr.bf16.mxu0 0
  %449 = vmatpush1.bf16.msra.mxu0 0
  %450 = vmatprep.subr.bf16.mxu0 0
  %451 = vmatpush1.bf16.msra.mxu0 0
  %452 = vmatprep.subr.bf16.mxu0 0
  %453 = vmatpush1.bf16.msra.mxu0 0
  %454 = vmatprep.subr.bf16.mxu0 0
  %455 = vmatpush1.bf16.msra.mxu0 0
  %456 = vmatprep.subr.bf16.mxu0 0
  %457 = vmatpush1.bf16.msra.mxu0 0
  %458 = vmatprep.mubr.bf16.mxu0 0
  %459 = vmatmul.mubr.bf16.gmra.mrb[0].mxu0 %v351
  %v460 = vpop.f32.mrb[0].mxu0
  %v461 = vadd.f32 %v376, %v460
  %v462 = vpop.f32.mrb[0].mxu0
  %v463 = vpop.f32.mrb[0].mxu0
  %v464 = vadd.f32 %v376, %v463
  %v465 = vpop.f32.mrb[0].mxu0
  %466 = vmatprep.mubr.bf16.mxu0 0
  %467 = vmatmul.mubr.bf16.gmra.mrb[0].mxu0 %v352
  %v468 = vpop.f32.mrb[0].mxu0
  %v469 = vadd.f32 %v376, %v468
  %v470 = vpop.f32.mrb[0].mxu0
  %v471 = vpop.f32.mrb[0].mxu0
  %v472 = vadd.f32 %v376, %v471
  %v473 = vpop.f32.mrb[0].mxu0
  %474 = vmatprep.mubr.bf16.mxu0 0
  %475 = vmatmul.mubr.bf16.gmra.mrb[0].mxu0 %v353
  %v476 = vpop.f32.mrb[0].mxu0
  %v477 = vadd.f32 %v376, %v476
  %v478 = vpop.f32.mrb[0].mxu0
  %v479 = vpop.f32.mrb[0].mxu0
  %v480 = vadd.f32 %v376, %v479
  %v481 = vpop.f32.mrb[0].mxu0
  %482 = vmatprep.mubr.bf16.mxu0 0
  %483 = vmatmul.mubr.bf16.gmra.mrb[0].mxu0 %v354
  %v484 = vpop.f32.mrb[0].mxu0
  %v485 = vadd.f32 %v376, %v484
  %v486 = vpop.f32.mrb[0].mxu0
  %v487 = vpop.f32.mrb[0].mxu0
  %v488 = vadd.f32 %v376, %v487
  %v489 = vpop.f32.mrb[0].mxu0
  %490 = vdwg.mxu0
  %491 = vst [vmem:[%s7] sm:$0xff] %v461
  %492 = vst [vmem:[%s7 + $0x8] sm:$0xff] %v464
  %493 = vst [vmem:[%s7 + $0x10] sm:$0xff] %v469
  %494 = vst [vmem:[%s7 + $0x18] sm:$0xff] %v472
  %495 = vst [vmem:[%s7 + $0x20] sm:$0xff] %v477
  %496 = vst [vmem:[%s7 + $0x28] sm:$0xff] %v480
  %497 = vst [vmem:[%s7 + $0x30] sm:$0xff] %v485
  %498 = vst [vmem:[%s7 + $0x38] sm:$0xff] %v488
  // Predicated region
  $region30: #{regressor_forward.1} parent=0 // pred_check
    _
  $region31: #{regressor_forward.1} parent=0 // pred_check_branch
    %500 = sbr.rel (0) target = $region33
  $region32: #{regressor_forward.1} parent=0 // pred_region
    _
  $region33: #{regressor_forward.1} parent=0 // pred_fallthru
    _
  // Predicated region
  $region34: #{regressor_forward.1} parent=0 // pred_check
    _
  $region35: #{regressor_forward.1} parent=0 // pred_check_branch
    %502 = sbr.rel (0) target = $region37
  $region36: #{regressor_forward.1} parent=0 // pred_region
    _
  $region37: #{regressor_forward.1} parent=0 // pred_fallthru
    _

</llo_original>
